<compile_context>
chip_gen: v5e
topology: v5e:2x2
jax: 0.10.0
libtpu: 0.0.40
codegen_flags: <defaults>
</compile_context>

<pallas_src>
import functools

import jax
import jax.numpy as jnp
from jax.experimental import pallas as pl
from jax.experimental.pallas import tpu as pltpu


def _round_up(x, m):
    return (x + m - 1) // m * m


def _choose_tile(dim, pref):
    """Pick a multiple-of-128 tile (<= pref) for `dim`.

    Prefers the largest tile whose zero-padding overhead is <= 12.5%; falls
    back to the tile minimizing padding.  Returns (tile, padded_dim) with
    padded_dim a multiple of tile.
    """
    base = _round_up(max(int(dim), 1), 128)
    cap = min(_round_up(int(pref), 128), base)
    best = None
    t = cap
    while t >= 128:
        padded = _round_up(base, t)
        if (padded - base) * 8 <= base:  # overhead <= 12.5%
            return t, padded
        if best is None or padded < best[1]:
            best = (t, padded)
        t -= 128
    return best


def _default_vmem_limit_bytes():
    cap = 64 * 1024 * 1024  # conservative fallback (v7x per-core VMEM)
    try:
        cap = int(pltpu.get_tpu_info().vmem_capacity_bytes)
    except Exception:
        pass
    # ~70% of physical, capped: ~88 MiB on v5e/v6e (128 MiB), ~44 MiB on v7x.
    return min(int(cap * 0.70), 88 * 1024 * 1024)


def _cast_pad(a, rows, cols, dtype):
    """Cast to `dtype` then zero-pad to (rows, cols); no-ops when aligned."""
    a = a.astype(dtype)
    pr, pc = rows - a.shape[0], cols - a.shape[1]
    if pr or pc:
        a = jnp.pad(a, ((0, pr), (0, pc)))
    return a


def _matmul_resident_b_kernel(a_ref, b_ref, o_ref):
    # A slab (tm, K) streamed from HBM; B panel (K, tn) stays VMEM-resident
    # across the row axis; one MXU pass straight to the lane-dense output
    # tile (no accumulator scratch, no k-axis pipeline bubbles).
    o_ref[...] = jnp.dot(a_ref[...], b_ref[...],
                         preferred_element_type=jnp.float32).astype(o_ref.dtype)


def _matmul_acc_kernel(a_ref, b_ref, o_ref, acc_ref):
    # Fallback: standard tiled matmul, resident f32 accumulator over k.
    @pl.when(pl.program_id(2) == 0)
    def _init():
        acc_ref[...] = jnp.zeros_like(acc_ref)

    acc_ref[...] += jnp.dot(a_ref[...], b_ref[...],
                            preferred_element_type=jnp.float32)

    @pl.when(pl.program_id(2) == pl.num_programs(2) - 1)
    def _store():
        o_ref[...] = acc_ref[...].astype(o_ref.dtype)


def _matmul_pallas(a, b, *, tm, tn, tk, out_dtype, vmem_limit_bytes,
                   a_buffers=None):
    """C = A @ B with A:(M,K), B:(K,N). Shapes must be tile-aligned."""
    m, k = a.shape
    k2, n = b.shape
    assert k == k2 and m % tm == 0 and k % tk == 0 and n % tn == 0

    it_a = a.dtype.itemsize
    it_b = b.dtype.itemsize
    it_o = jnp.dtype(out_dtype).itemsize
    n_abuf = 2 if a_buffers is None else max(int(a_buffers), 2)

    # --- Collapsed-K path: B panel resident in VMEM, no k grid axis. -------
    resident_need = (n_abuf * tm * k * it_a        # streamed A slabs
                     + 2 * k * tn * it_b           # resident/double-buffered B
                     + 2 * tm * tn * it_o)         # output tiles
    if resident_need <= vmem_limit_bytes - (2 << 20):
        cost = pl.CostEstimate(
            flops=2 * m * n * k,
            transcendentals=0,
            bytes_accessed=m * k * it_a + (m // tm) * k * n * it_b
            + m * n * it_o,
        )
        a_spec_kwargs = {}
        if a_buffers is not None and a_buffers > 2:
            a_spec_kwargs["pipeline_mode"] = pl.Buffered(int(a_buffers))
        return pl.pallas_call(
            _matmul_resident_b_kernel,
            out_shape=jax.ShapeDtypeStruct((m, n), out_dtype),
            grid_spec=pltpu.PrefetchScalarGridSpec(
                num_scalar_prefetch=0,
                grid=(m // tm, n // tn),
                in_specs=[
                    pl.BlockSpec((tm, k), lambda i, j: (i, 0),
                                 **a_spec_kwargs),
                    pl.BlockSpec((k, tn), lambda i, j: (0, j)),
                ],
                out_specs=pl.BlockSpec((tm, tn), lambda i, j: (i, j)),
            ),
            compiler_params=pltpu.CompilerParams(
                # Row (adj-stream) axis marked parallel so it can shard across
                # v7x's two TensorCores; neutral on v5e/v6e.
                dimension_semantics=("parallel", "parallel"),
                vmem_limit_bytes=int(vmem_limit_bytes),
            ),
            cost_estimate=cost,
        )(a, b)

    # --- Fallback: 3-D grid with f32 VMEM accumulator over k. --------------
    cost = pl.CostEstimate(
        flops=2 * m * n * k,
        transcendentals=0,
        bytes_accessed=(n // tn) * m * k * it_a + (m // tm) * k * n * it_b
        + m * n * it_o,
    )
    return pl.pallas_call(
        _matmul_acc_kernel,
        out_shape=jax.ShapeDtypeStruct((m, n), out_dtype),
        grid_spec=pltpu.PrefetchScalarGridSpec(
            num_scalar_prefetch=0,
            grid=(m // tm, n // tn, k // tk),
            in_specs=[
                pl.BlockSpec((tm, tk), lambda i, j, kk: (i, kk)),
                pl.BlockSpec((tk, tn), lambda i, j, kk: (kk, j)),
            ],
            out_specs=pl.BlockSpec((tm, tn), lambda i, j, kk: (i, j)),
            scratch_shapes=[pltpu.VMEM((tm, tn), jnp.float32)],
        ),
        compiler_params=pltpu.CompilerParams(
            dimension_semantics=("parallel", "parallel", "arbitrary"),
            vmem_limit_bytes=int(vmem_limit_bytes),
        ),
        cost_estimate=cost,
    )(a, b)


def graph_convolution(x, adj, weight, *, compute_dtype=jnp.bfloat16,
                      tile_nodes=512, tile_out=512, tile_in=512,
                      vmem_limit_bytes=None, adj_buffers=None):
    """GCN forward: adj @ (x @ weight).

    x: (N, F_in), adj: (N, N), weight: (F_in, F_out) -> (N, F_out) in
    result_type(x, weight).  `compute_dtype` (default bf16) is the MXU
    operand dtype for adj / x / weight / the intermediate `support`;
    accumulation is always f32 inside the kernels.  Pass
    compute_dtype=jnp.float32 for full-precision operands.
    """
    n_nodes, f_in = x.shape
    f_out = weight.shape[1]
    assert adj.shape == (n_nodes, n_nodes)
    assert weight.shape[0] == f_in

    out_dtype = jnp.result_type(x.dtype, weight.dtype)
    cdt = jnp.dtype(out_dtype if compute_dtype is None else compute_dtype)
    if vmem_limit_bytes is None:
        vmem_limit_bytes = _default_vmem_limit_bytes()

    # Tiles + padded dims.  Padding with zeros is exact: padded adj columns
    # only ever multiply all-zero padded support rows.
    t_n, n_p = _choose_tile(n_nodes, tile_nodes)
    t_fi, fi_p = _choose_tile(f_in, tile_in)
    t_fo, fo_p = _choose_tile(f_out, tile_out)

    x_p = _cast_pad(x, n_p, fi_p, cdt)
    w_p = _cast_pad(weight, fi_p, fo_p, cdt)
    adj_p = _cast_pad(adj, n_p, n_p, cdt)

    # Stage 1: support = x @ weight (computed once, kept in compute dtype so
    # the HBM round trip between the two kernels is halved when cdt == bf16).
    support_p = _matmul_pallas(x_p, w_p, tm=t_n, tn=t_fo, tk=t_fi,
                               out_dtype=cdt,
                               vmem_limit_bytes=vmem_limit_bytes)
    # Stage 2: out = adj @ support (HBM-bound on the adjacency stream).
    out_p = _matmul_pallas(adj_p, support_p, tm=t_n, tn=t_fo, tk=t_n,
                           out_dtype=out_dtype,
                           vmem_limit_bytes=vmem_limit_bytes,
                           a_buffers=adj_buffers)
    return out_p[:n_nodes, :f_out]


if __name__ == "__main__":
    def ref_gcn(x, adj, w):
        return adj @ (x @ w)

    key = jax.random.PRNGKey(0)

    # Case 1: small module-like shapes, f32 operands -> tight tolerance.
    N, F_IN, F_OUT = 16, 32, 64
    k_x, k_adj, k_w, key = jax.random.split(key, 4)
    x = jax.random.normal(k_x, (N, F_IN), dtype=jnp.float32)
    adj_raw = jax.random.uniform(k_adj, (N, N), dtype=jnp.float32)
    adj = adj_raw / jnp.sum(adj_raw, axis=1, keepdims=True)
    w = jax.random.normal(k_w, (F_IN, F_OUT), dtype=jnp.float32)

    gcn_f32 = jax.jit(functools.partial(graph_convolution,
                                        compute_dtype=jnp.float32))
    out = gcn_f32(x, adj, w)
    jax.block_until_ready(out)
    assert out.shape == (N, F_OUT)
    assert jnp.allclose(out, ref_gcn(x, adj, w), atol=1e-4, rtol=1e-4)

    # Case 2: larger, non-128-aligned shapes, f32 operands -> exercises the
    # padding / tile-selection and the resident-B fast path.
    N2, F_IN2, F_OUT2 = 320, 192, 160
    k_x, k_adj, k_w, key = jax.random.split(key, 4)
    x2 = jax.random.normal(k_x, (N2, F_IN2), dtype=jnp.float32)
    adj2_raw = jax.random.uniform(k_adj, (N2, N2), dtype=jnp.float32)
    adj2 = adj2_raw / jnp.sum(adj2_raw, axis=1, keepdims=True)
    w2 = jax.random.normal(k_w, (F_IN2, F_OUT2), dtype=jnp.float32)

    out2 = gcn_f32(x2, adj2, w2)
    jax.block_until_ready(out2)
    assert out2.shape == (N2, F_OUT2)
    assert jnp.allclose(out2, ref_gcn(x2, adj2, w2), atol=1e-2, rtol=1e-2)

    # Case 3: default bf16 operand path (f32 accumulation) -> relaxed
    # tolerance against the f32 reference.
    out3 = jax.jit(graph_convolution)(x2, adj2, w2)
    jax.block_until_ready(out3)
    assert out3.shape == (N2, F_OUT2)
    assert out3.dtype == jnp.float32
    assert jnp.allclose(out3, ref_gcn(x2, adj2, w2), atol=5e-2, rtol=5e-2)

    print("KERNEL_OK")
</pallas_src>

<mosaic_0001>
module attributes {stable_mosaic.version = 11 : i64} {
  func.func @_matmul_resident_b_kernel(%arg0: i32, %arg1: i32, %arg2: memref<128x128xf32, #tpu.memory_space<vmem>>, %arg3: memref<128x128xf32, #tpu.memory_space<vmem>>, %arg4: memref<128x128xf32, #tpu.memory_space<vmem>>) attributes {dimension_semantics = [#tpu.dimension_semantics<parallel>, #tpu.dimension_semantics<parallel>], iteration_bounds = array<i64: 1, 1>, scalar_prefetch = 0 : i64, scratch_operands = 0 : i64, tpu.core_type = #tpu.core_type<tc>, window_params = [{transform_indices = @transform_0, window_bounds = array<i64: 128, 128>}, {transform_indices = @transform_1, window_bounds = array<i64: 128, 128>}, {transform_indices = @transform_2, window_bounds = array<i64: 128, 128>}]} {
    %c0 = arith.constant 0 : index
    %c0_0 = arith.constant 0 : index
    %0 = vector.load %arg2[%c0, %c0_0] : memref<128x128xf32, #tpu.memory_space<vmem>>, vector<128x128xf32>
    %c0_1 = arith.constant 0 : index
    %c0_2 = arith.constant 0 : index
    %1 = vector.load %arg3[%c0_1, %c0_2] : memref<128x128xf32, #tpu.memory_space<vmem>>, vector<128x128xf32>
    %cst = arith.constant dense<0.000000e+00> : vector<128x128xf32>
    %2 = tpu.matmul %0, %1, %cst {dimension_numbers = #tpu.dot_dimension_numbers<[1], [0], [0], [1], [0, 0, 1, 1], [], []>} : vector<128x128xf32>, vector<128x128xf32>, vector<128x128xf32> -> vector<128x128xf32>
    %c0_3 = arith.constant 0 : index
    %c0_4 = arith.constant 0 : index
    %3 = vector.load %arg4[%c0_3, %c0_4] : memref<128x128xf32, #tpu.memory_space<vmem>>, vector<128x128xf32>
    tpu.vector_store %arg4[%c0_3, %c0_4], %2 {strides = array<i32>} : memref<128x128xf32, #tpu.memory_space<vmem>>, vector<128x128xf32>,
    return
  }
  func.func @transform_0(%arg0: i32, %arg1: i32) -> (i32, i32) {
    %c0_i32 = arith.constant 0 : i32
    %c0_i32_0 = arith.constant 0 : i32
    return %arg0, %c0_i32 : i32, i32
  }
  func.func @transform_1(%arg0: i32, %arg1: i32) -> (i32, i32) {
    %c0_i32 = arith.constant 0 : i32
    %c0_i32_0 = arith.constant 0 : i32
    return %c0_i32, %arg1 : i32, i32
  }
  func.func @transform_2(%arg0: i32, %arg1: i32) -> (i32, i32) {
    %c0_i32 = arith.constant 0 : i32
    return %arg0, %arg1 : i32, i32
  }
}

</mosaic_0001>

<llo_original>
// kernel: graph_convolution.2
$region0: #{graph_convolution.2}
  #allocation0 [shape = 'u32[]', space=smem, size = 0x4, offset = 0x4, fixed_abs, tag = 'smem constant byte address 0x4 - core index']
  #allocation1 [shape = 'u32[72,128]{1,0:T(1,128)}', space=vmem, size = 0x9000, scoped, tag = 'internal scratch']
  %s0 = inlined_call_operand.vmem [shape: f32[128,128], index: 0, kind: input, shape index: {}]
  %s1 = inlined_call_operand.vmem [shape: f32[128,128], index: 1, kind: input, shape index: {}]
  %s2 = inlined_call_operand.vmem [shape: f32[128,128], index: 2, kind: output, shape index: {}]
  %s3 = sld [smem:[#allocation0]]
  $region18: #{graph_convolution.2} parent=0
    _
  %s5 = ssub.s32 1, %s3
  %s6 = scalar_select 0, %s5, %s3
  // Predicated region
  $region2: #{graph_convolution.2} parent=0 // pred_check
    _
  $region3: #{graph_convolution.2} parent=0 // pred_check_branch
    %8 = sbr.rel (0) target = $region5
  $region4: #{graph_convolution.2} parent=0 // pred_region
    _
  $region5: #{graph_convolution.2} parent=0 // pred_fallthru
    _
  // Predicated region
  $region6: #{graph_convolution.2} parent=0 // pred_check
    _
  $region7: #{graph_convolution.2} parent=0 // pred_check_branch
    %10 = sbr.rel (0) target = $region9
  $region8: #{graph_convolution.2} parent=0 // pred_region
    _
  $region9: #{graph_convolution.2} parent=0 // pred_fallthru
    _
  %v11 = vld [vmem:[%s0] sm:$0xff]
  %v12 = vld [vmem:[%s0 + $0x8] sm:$0xff]
  %v13 = vld [vmem:[%s0 + $0x10] sm:$0xff]
  %v14 = vld [vmem:[%s0 + $0x18] sm:$0xff]
  %v15 = vld [vmem:[%s0 + $0x20] sm:$0xff]
  %v16 = vld [vmem:[%s0 + $0x28] sm:$0xff]
  %v17 = vld [vmem:[%s0 + $0x30] sm:$0xff]
  %v18 = vld [vmem:[%s0 + $0x38] sm:$0xff]
  %v19 = vld [vmem:[%s0 + $0x40] sm:$0xff]
  %v20 = vld [vmem:[%s0 + $0x48] sm:$0xff]
  %v21 = vld [vmem:[%s0 + $0x50] sm:$0xff]
  %v22 = vld [vmem:[%s0 + $0x58] sm:$0xff]
  %v23 = vld [vmem:[%s0 + $0x60] sm:$0xff]
  %v24 = vld [vmem:[%s0 + $0x68] sm:$0xff]
  %v25 = vld [vmem:[%s0 + $0x70] sm:$0xff]
  %v26 = vld [vmem:[%s0 + $0x78] sm:$0xff]
  %v27 = vld [vmem:[%s1] sm:$0xff]
  %v28 = vld [vmem:[%s1 + $0x8] sm:$0xff]
  %v29 = vld [vmem:[%s1 + $0x10] sm:$0xff]
  %v30 = vld [vmem:[%s1 + $0x18] sm:$0xff]
  %v31 = vld [vmem:[%s1 + $0x20] sm:$0xff]
  %v32 = vld [vmem:[%s1 + $0x28] sm:$0xff]
  %v33 = vld [vmem:[%s1 + $0x30] sm:$0xff]
  %v34 = vld [vmem:[%s1 + $0x38] sm:$0xff]
  %v35 = vld [vmem:[%s1 + $0x40] sm:$0xff]
  %v36 = vld [vmem:[%s1 + $0x48] sm:$0xff]
  %v37 = vld [vmem:[%s1 + $0x50] sm:$0xff]
  %v38 = vld [vmem:[%s1 + $0x58] sm:$0xff]
  %v39 = vld [vmem:[%s1 + $0x60] sm:$0xff]
  %v40 = vld [vmem:[%s1 + $0x68] sm:$0xff]
  %v41 = vld [vmem:[%s1 + $0x70] sm:$0xff]
  %v42 = vld [vmem:[%s1 + $0x78] sm:$0xff]
  %43 = vmatpush.msra.mxu0 %v42
  %44 = vmatpush.msra.mxu0 %v41
  %45 = vmatpush.msra.mxu0 %v40
  %46 = vmatpush.msra.mxu0 %v39
  %47 = vmatpush.msra.mxu0 %v38
  %48 = vmatpush.msra.mxu0 %v37
  %49 = vmatpush.msra.mxu0 %v36
  %50 = vmatpush.msra.mxu0 %v35
  %51 = vmatpush.msra.mxu0 %v34
  %52 = vmatpush.msra.mxu0 %v33
  %53 = vmatpush.msra.mxu0 %v32
  %54 = vmatpush.msra.mxu0 %v31
  %55 = vmatpush.msra.mxu0 %v30
  %56 = vmatpush.msra.mxu0 %v29
  %57 = vmatpush.msra.mxu0 %v28
  %58 = vmatpush.msra.mxu0 %v27
  %59 = vmatmul.f32.gmra.mxu0 %v11
  %v60 = vpop.f32.mrf.mxu0
  %v61 = vadd.f32 0.0, %v60
  %62 = vmatmul.f32.gmra.mxu0 %v12
  %v63 = vpop.f32.mrf.mxu0
  %v64 = vadd.f32 0.0, %v63
  %65 = vmatmul.f32.gmra.mxu0 %v13
  %v66 = vpop.f32.mrf.mxu0
  %v67 = vadd.f32 0.0, %v66
  %68 = vmatmul.f32.gmra.mxu0 %v14
  %v69 = vpop.f32.mrf.mxu0
  %v70 = vadd.f32 0.0, %v69
  %71 = vmatmul.f32.gmra.mxu0 %v15
  %v72 = vpop.f32.mrf.mxu0
  %v73 = vadd.f32 0.0, %v72
  %74 = vmatmul.f32.gmra.mxu0 %v16
  %v75 = vpop.f32.mrf.mxu0
  %v76 = vadd.f32 0.0, %v75
  %77 = vmatmul.f32.gmra.mxu0 %v17
  %v78 = vpop.f32.mrf.mxu0
  %v79 = vadd.f32 0.0, %v78
  %80 = vmatmul.f32.gmra.mxu0 %v18
  %v81 = vpop.f32.mrf.mxu0
  %v82 = vadd.f32 0.0, %v81
  %83 = vmatmul.f32.gmra.mxu0 %v19
  %v84 = vpop.f32.mrf.mxu0
  %v85 = vadd.f32 0.0, %v84
  %86 = vmatmul.f32.gmra.mxu0 %v20
  %v87 = vpop.f32.mrf.mxu0
  %v88 = vadd.f32 0.0, %v87
  %89 = vmatmul.f32.gmra.mxu0 %v21
  %v90 = vpop.f32.mrf.mxu0
  %v91 = vadd.f32 0.0, %v90
  %92 = vmatmul.f32.gmra.mxu0 %v22
  %v93 = vpop.f32.mrf.mxu0
  %v94 = vadd.f32 0.0, %v93
  %95 = vmatmul.f32.gmra.mxu0 %v23
  %v96 = vpop.f32.mrf.mxu0
  %v97 = vadd.f32 0.0, %v96
  %98 = vmatmul.f32.gmra.mxu0 %v24
  %v99 = vpop.f32.mrf.mxu0
  %v100 = vadd.f32 0.0, %v99
  %101 = vmatmul.f32.gmra.mxu0 %v25
  %v102 = vpop.f32.mrf.mxu0
  %v103 = vadd.f32 0.0, %v102
  %104 = vmatmul.f32.gmra.mxu0 %v26
  %v105 = vpop.f32.mrf.mxu0
  %v106 = vadd.f32 0.0, %v105
  %107 = vdwg.mxu0
  %108 = vst [vmem:[%s2] sm:$0xff] %v61
  %109 = vst [vmem:[%s2 + $0x8] sm:$0xff] %v64
  %110 = vst [vmem:[%s2 + $0x10] sm:$0xff] %v67
  %111 = vst [vmem:[%s2 + $0x18] sm:$0xff] %v70
  %112 = vst [vmem:[%s2 + $0x20] sm:$0xff] %v73
  %113 = vst [vmem:[%s2 + $0x28] sm:$0xff] %v76
  %114 = vst [vmem:[%s2 + $0x30] sm:$0xff] %v79
  %115 = vst [vmem:[%s2 + $0x38] sm:$0xff] %v82
  %116 = vst [vmem:[%s2 + $0x40] sm:$0xff] %v85
  %117 = vst [vmem:[%s2 + $0x48] sm:$0xff] %v88
  %118 = vst [vmem:[%s2 + $0x50] sm:$0xff] %v91
  %119 = vst [vmem:[%s2 + $0x58] sm:$0xff] %v94
  %120 = vst [vmem:[%s2 + $0x60] sm:$0xff] %v97
  %121 = vst [vmem:[%s2 + $0x68] sm:$0xff] %v100
  %122 = vst [vmem:[%s2 + $0x70] sm:$0xff] %v103
  %123 = vst [vmem:[%s2 + $0x78] sm:$0xff] %v106
  // Predicated region
  $region10: #{graph_convolution.2} parent=0 // pred_check
    _
  $region11: #{graph_convolution.2} parent=0 // pred_check_branch
    %125 = sbr.rel (0) target = $region13
  $region12: #{graph_convolution.2} parent=0 // pred_region
    _
  $region13: #{graph_convolution.2} parent=0 // pred_fallthru
    _
  // Predicated region
  $region14: #{graph_convolution.2} parent=0 // pred_check
    _
  $region15: #{graph_convolution.2} parent=0 // pred_check_branch
    %127 = sbr.rel (0) target = $region17
  $region16: #{graph_convolution.2} parent=0 // pred_region
    _
  $region17: #{graph_convolution.2} parent=0 // pred_fallthru
    _

</llo_original>
